<compile_context>
chip_gen: v6e
topology: v6e:2x2x1
jax: 0.10.0
libtpu: 0.0.40
codegen_flags: <defaults>
</compile_context>

<pallas_src>
import functools

import jax
import jax.numpy as jnp
from jax.experimental import pallas as pl
from jax.experimental.pallas import tpu as pltpu


# ----------------------------- shared sincos --------------------------------
# Quadrant range reduction shared between sin and cos (Cody-Waite split of
# pi/2, cephes single-precision polynomial coefficients). Exact products
# n * c1 / n * c2 for |n| up to ~2^14, i.e. |x| up to ~2.5e4 — same regime as
# an f32 libm sincos; matches jnp.sin/jnp.cos to ~1e-6 absolute there.
_TWO_OVER_PI = 0.6366197723675814
_PIO2_1 = 1.5703125                     # 8 significant bits
_PIO2_2 = 4.837512969970703125e-04      # ~12 significant bits
_PIO2_3 = 7.549789948768648e-08         # remainder
_SIN_C0 = -1.9515295891e-4
_SIN_C1 = 8.3321608736e-3
_SIN_C2 = -1.6666654611e-1
_COS_C0 = 2.443315711809948e-5
_COS_C1 = -1.388731625493765e-3
_COS_C2 = 4.166664568298827e-2


def _sincos(x):
    """Return (sin(x), cos(x)) for f32 x with one shared range reduction."""
    n = jnp.floor(x * _TWO_OVER_PI + 0.5)            # nearest multiple of pi/2
    r = x - n * _PIO2_1
    r = r - n * _PIO2_2
    r = r - n * _PIO2_3                               # |r| <~ pi/4
    z = r * r
    s = r + r * z * (_SIN_C2 + z * (_SIN_C1 + z * _SIN_C0))
    c = 1.0 - 0.5 * z + z * z * (_COS_C2 + z * (_COS_C1 + z * _COS_C0))
    q = n.astype(jnp.int32)
    swap = (q & 1) == 1                               # odd quadrant: swap s/c
    sin_v = jnp.where(swap, c, s)
    cos_v = jnp.where(swap, s, c)
    sin_neg = (q & 2) == 2                            # quadrants 2,3: -sin
    cos_neg = ((q + 1) & 2) == 2                      # quadrants 1,2: -cos
    sin_v = jnp.where(sin_neg, -sin_v, sin_v)
    cos_v = jnp.where(cos_neg, -cos_v, cos_v)
    return sin_v, cos_v


# --------------------------------- kernel ------------------------------------
def _pos_emb_kernel(pos_ref, freq_ref, out_ref):
    # pos_ref:  (tm, 1)       float32  -- tile of positions (column vector)
    # freq_ref: (1, half_p)   float32  -- padded inv_freq row, VMEM-resident
    # out_ref:  (tm, 2*half_p) out dtype -- [sin | cos], both 128-lane aligned
    half_p = freq_ref.shape[1]
    x = pos_ref[...] * freq_ref[...]                  # outer product (tm, half_p)
    s, c = _sincos(x)
    # Two direct lane-dense slice stores (no concat temp, no masked vst).
    out_ref[:, :half_p] = s.astype(out_ref.dtype)
    out_ref[:, half_p:] = c.astype(out_ref.dtype)


# -------------------------------- wrapper -------------------------------------
def make_inv_freq(embed_dim: int) -> jnp.ndarray:
    # matches: 1 / 10000 ** (arange(0, embed_dim, 2) / embed_dim)
    return 1.0 / (10000.0 ** (jnp.arange(0.0, embed_dim, 2.0) / embed_dim))


def _round_up(x: int, m: int) -> int:
    return ((x + m - 1) // m) * m


def _choose_row_tile(L: int, D_p: int, out_bytes: int) -> int:
    """Rows per tile.

    Budget ~12 MiB for (double-buffered output + in-body f32 intermediates)
    per tile -> safe under v5e's 16 MiB default scoped VMEM even before the
    explicit vmem_limit_bytes, and well under v6e/v7x limits. Rows are aligned
    to the output dtype's sublane packing, and for L > 256 the tile is capped
    so there are >= 2 tiles (v7x megacore sharding).
    """
    row_align = max(8, 32 // out_bytes)       # 8 f32 / 16 bf16 / 32 int8-fp8
    if L <= row_align:
        return L                               # single full-extent block
    per_row_bytes = D_p * (2 * out_bytes + 16)  # 2x out buffer + ~4 f32 temps
    budget_rows = max(row_align, (12 * 1024 * 1024) // max(1, per_row_bytes))
    tm = min(1024, budget_rows, L)
    if L > 256:
        # Guarantee >= 2 tiles so both v7x TensorCores get work.
        tm = min(tm, _round_up(pl.cdiv(L, 2), row_align))
    tm = max(row_align, (tm // row_align) * row_align)
    if tm >= L:
        return L
    # Prefer an even tile count for a balanced 2-TensorCore split.
    n_tiles = pl.cdiv(L, tm)
    if n_tiles > 1 and n_tiles % 2 == 1:
        tm = _round_up(pl.cdiv(L, n_tiles + 1), row_align)
    return tm


@functools.partial(jax.jit, static_argnames=("bsz", "out_dtype"))
def positional_embedding(pos_seq: jnp.ndarray,
                         inv_freq: jnp.ndarray,
                         bsz=None,
                         out_dtype=jnp.float32):
    """JAX/Pallas equivalent of _PositionalEmbedding.forward.

    pos_seq:  (L,)   float
    inv_freq: (D/2,) float
    returns:  (L, 1, D) or (L, bsz, D)
    """
    L = pos_seq.shape[0]
    half = inv_freq.shape[0]
    D = 2 * half

    # Pad the frequency row up to a multiple of 128 lanes so every store in
    # the kernel is an unmasked, lane-aligned vst (padded lanes sliced off).
    half_p = max(128, _round_up(half, 128))
    D_p = 2 * half_p

    pos2d = pos_seq.reshape(L, 1).astype(jnp.float32)
    freq = inv_freq.astype(jnp.float32)
    if half_p != half:
        freq = jnp.pad(freq, (0, half_p - half))
    freq2d = freq.reshape(1, half_p)

    out_bytes = jnp.dtype(out_dtype).itemsize
    tm = _choose_row_tile(L, D_p, out_bytes)
    grid = (pl.cdiv(L, tm),)

    cost = pl.CostEstimate(
        flops=30 * L * half_p,                # shared sincos ~30 VALU ops/elem
        transcendentals=2 * L * half_p,
        bytes_accessed=L * D_p * out_bytes + L * 4 + half_p * 4,
    )

    out = pl.pallas_call(
        _pos_emb_kernel,
        out_shape=jax.ShapeDtypeStruct((L, D_p), out_dtype),
        grid=grid,
        in_specs=[
            # Position column: one (tm, 1) tile per grid step.
            pl.BlockSpec((tm, 1), lambda i: (i, 0)),
            # inv_freq row: replicated (same block every step -> VMEM-resident).
            pl.BlockSpec((1, half_p), lambda i: (0, 0)),
        ],
        out_specs=pl.BlockSpec((tm, D_p), lambda i: (i, 0)),
        compiler_params=pltpu.CompilerParams(
            # Independent row tiles: shard across both TensorCores on v7x.
            dimension_semantics=("parallel",),
            # Explicit scoped-VMEM limit (> v5e's 16 MiB default, <= all
            # physical capacities) so pipelining never silently degrades.
            vmem_limit_bytes=32 * 1024 * 1024,
        ),
        cost_estimate=cost,
    )(pos2d, freq2d)

    if half_p != half:
        # Drop the padded lanes and reassemble [sin | cos] (cheap XLA glue).
        out = jnp.concatenate([out[:, :half], out[:, half_p:half_p + half]],
                              axis=-1)

    # Pure layout glue; broadcast is left lazy for the consumer to fuse.
    pos_emb = out[:, None, :]                             # (L, 1, D)
    if bsz is not None:
        pos_emb = jnp.broadcast_to(pos_emb, (L, bsz, D))  # expand(-1, bsz, -1)
    return pos_emb


# ------------------------------- reference ------------------------------------
def _reference(pos_seq, inv_freq, bsz):
    sinusoid = jnp.outer(pos_seq, inv_freq)
    ref = jnp.concatenate([jnp.sin(sinusoid), jnp.cos(sinusoid)], axis=-1)
    ref = ref[:, None, :]
    if bsz is not None:
        ref = jnp.broadcast_to(ref, (pos_seq.shape[0], bsz, ref.shape[-1]))
    return ref


if __name__ == "__main__":
    # --- small shapes matching the module (seq=8, hidden=32, batch=2) -------
    embed_dim = 32
    seq_len = 8
    bsz = 2

    key = jax.random.PRNGKey(0)
    # Transformer-XL style descending positions plus a small random jitter so
    # the PRNG key is genuinely exercised (forward handles any real positions).
    base = jnp.arange(seq_len - 1, -1, -1, dtype=jnp.float32)
    jitter = jax.random.uniform(key, (seq_len,), dtype=jnp.float32) * 0.01
    pos_seq = base + jitter
    inv_freq = make_inv_freq(embed_dim)

    out = positional_embedding(pos_seq, inv_freq, bsz=bsz)
    out = jax.block_until_ready(out)
    ref = _reference(pos_seq, inv_freq, bsz)
    assert out.shape == (seq_len, bsz, embed_dim)
    assert jnp.allclose(out, ref, atol=1e-5, rtol=1e-5), "mismatch (small)"

    # --- tiled path: grid has 2 parallel tiles, half already lane-aligned ----
    L2, D2 = 1024, 128
    pos_seq2 = jnp.arange(L2 - 1, -1, -1, dtype=jnp.float32)
    inv_freq2 = make_inv_freq(D2)
    out2 = jax.block_until_ready(positional_embedding(pos_seq2, inv_freq2, bsz=None))
    ref2 = _reference(pos_seq2, inv_freq2, None)
    assert out2.shape == (L2, 1, D2)
    assert jnp.allclose(out2, ref2, atol=1e-5, rtol=1e-5), "mismatch (tiled)"

    # --- Transformer-XL d_model=410 (half=205 -> padded to 256 lanes) --------
    L3, D3 = 512, 410
    pos_seq3 = jnp.arange(L3 - 1, -1, -1, dtype=jnp.float32)
    inv_freq3 = make_inv_freq(D3)
    out3 = jax.block_until_ready(positional_embedding(pos_seq3, inv_freq3, bsz=None))
    ref3 = _reference(pos_seq3, inv_freq3, None)
    assert out3.shape == (L3, 1, D3)
    assert jnp.allclose(out3, ref3, atol=1e-5, rtol=1e-5), "mismatch (padded half)"

    print("KERNEL_OK")
</pallas_src>

<mosaic_0001>
module attributes {stable_mosaic.version = 11 : i64} {
  func.func @_pos_emb_kernel(%arg0: i32, %arg1: memref<8x1xf32, #tpu.memory_space<vmem>>, %arg2: memref<1x128xf32, #tpu.memory_space<vmem>>, %arg3: memref<8x256xf32, #tpu.memory_space<vmem>>) attributes {dimension_semantics = [#tpu.dimension_semantics<parallel>], iteration_bounds = array<i64: 1>, scalar_prefetch = 0 : i64, scratch_operands = 0 : i64, tpu.core_type = #tpu.core_type<tc>, window_params = [{transform_indices = @transform_0, window_bounds = array<i64: 8, 1>}, {pipeline_mode = #tpu.pipeline_mode<synchronous>, transform_indices = @transform_1, window_bounds = array<i64: 1, 128>}, {transform_indices = @transform_2, window_bounds = array<i64: 8, 256>}]} {
    %c0 = arith.constant 0 : index
    %c0_0 = arith.constant 0 : index
    %0 = vector.load %arg1[%c0, %c0_0] : memref<8x1xf32, #tpu.memory_space<vmem>>, vector<8x1xf32>
    %c0_1 = arith.constant 0 : index
    %c0_2 = arith.constant 0 : index
    %1 = vector.load %arg2[%c0_1, %c0_2] : memref<1x128xf32, #tpu.memory_space<vmem>>, vector<1x128xf32>
    %2 = vector.broadcast %0 : vector<8x1xf32> to vector<8x128xf32>
    %3 = vector.broadcast %1 : vector<1x128xf32> to vector<8x128xf32>
    %4 = arith.mulf %2, %3 : vector<8x128xf32>
    %cst = arith.constant 0.636619746 : f32
    %5 = vector.broadcast %cst : f32 to vector<8x128xf32>
    %6 = arith.mulf %4, %5 : vector<8x128xf32>
    %cst_3 = arith.constant 5.000000e-01 : f32
    %7 = vector.broadcast %cst_3 : f32 to vector<8x128xf32>
    %8 = arith.addf %6, %7 : vector<8x128xf32>
    %9 = math.floor %8 : vector<8x128xf32>
    %cst_4 = arith.constant 1.5703125 : f32
    %10 = vector.broadcast %cst_4 : f32 to vector<8x128xf32>
    %11 = arith.mulf %9, %10 : vector<8x128xf32>
    %12 = arith.subf %4, %11 : vector<8x128xf32>
    %cst_5 = arith.constant 4.83751297E-4 : f32
    %13 = vector.broadcast %cst_5 : f32 to vector<8x128xf32>
    %14 = arith.mulf %9, %13 : vector<8x128xf32>
    %15 = arith.subf %12, %14 : vector<8x128xf32>
    %cst_6 = arith.constant 7.549790e-08 : f32
    %16 = vector.broadcast %cst_6 : f32 to vector<8x128xf32>
    %17 = arith.mulf %9, %16 : vector<8x128xf32>
    %18 = arith.subf %15, %17 : vector<8x128xf32>
    %19 = arith.mulf %18, %18 : vector<8x128xf32>
    %20 = arith.mulf %18, %19 : vector<8x128xf32>
    %cst_7 = arith.constant -1.95152956E-4 : f32
    %21 = vector.broadcast %cst_7 : f32 to vector<8x128xf32>
    %22 = arith.mulf %19, %21 : vector<8x128xf32>
    %cst_8 = arith.constant 0.00833216123 : f32
    %23 = vector.broadcast %cst_8 : f32 to vector<8x128xf32>
    %24 = arith.addf %23, %22 : vector<8x128xf32>
    %25 = arith.mulf %19, %24 : vector<8x128xf32>
    %cst_9 = arith.constant -0.166666552 : f32
    %26 = vector.broadcast %cst_9 : f32 to vector<8x128xf32>
    %27 = arith.addf %26, %25 : vector<8x128xf32>
    %28 = arith.mulf %20, %27 : vector<8x128xf32>
    %29 = arith.addf %18, %28 : vector<8x128xf32>
    %cst_10 = arith.constant 5.000000e-01 : f32
    %30 = vector.broadcast %cst_10 : f32 to vector<8x128xf32>
    %31 = arith.mulf %30, %19 : vector<8x128xf32>
    %cst_11 = arith.constant 1.000000e+00 : f32
    %32 = vector.broadcast %cst_11 : f32 to vector<8x128xf32>
    %33 = arith.subf %32, %31 : vector<8x128xf32>
    %34 = arith.mulf %19, %19 : vector<8x128xf32>
    %cst_12 = arith.constant 2.44331568E-5 : f32
    %35 = vector.broadcast %cst_12 : f32 to vector<8x128xf32>
    %36 = arith.mulf %19, %35 : vector<8x128xf32>
    %cst_13 = arith.constant -0.00138873165 : f32
    %37 = vector.broadcast %cst_13 : f32 to vector<8x128xf32>
    %38 = arith.addf %37, %36 : vector<8x128xf32>
    %39 = arith.mulf %19, %38 : vector<8x128xf32>
    %cst_14 = arith.constant 0.0416666456 : f32
    %40 = vector.broadcast %cst_14 : f32 to vector<8x128xf32>
    %41 = arith.addf %40, %39 : vector<8x128xf32>
    %42 = arith.mulf %34, %41 : vector<8x128xf32>
    %43 = arith.addf %33, %42 : vector<8x128xf32>
    %44 = arith.fptosi %9 : vector<8x128xf32> to vector<8x128xi32>
    %c1_i32 = arith.constant 1 : i32
    %45 = vector.broadcast %c1_i32 : i32 to vector<8x128xi32>
    %46 = arith.andi %44, %45 : vector<8x128xi32>
    %c1_i32_15 = arith.constant 1 : i32
    %47 = vector.broadcast %c1_i32_15 : i32 to vector<8x128xi32>
    %48 = arith.cmpi eq, %46, %47 : vector<8x128xi32>
    %49 = arith.select %48, %43, %29 : vector<8x128xi1>, vector<8x128xf32>
    %50 = arith.select %48, %29, %43 : vector<8x128xi1>, vector<8x128xf32>
    %c2_i32 = arith.constant 2 : i32
    %51 = vector.broadcast %c2_i32 : i32 to vector<8x128xi32>
    %52 = arith.andi %44, %51 : vector<8x128xi32>
    %c2_i32_16 = arith.constant 2 : i32
    %53 = vector.broadcast %c2_i32_16 : i32 to vector<8x128xi32>
    %54 = arith.cmpi eq, %52, %53 : vector<8x128xi32>
    %c1_i32_17 = arith.constant 1 : i32
    %55 = vector.broadcast %c1_i32_17 : i32 to vector<8x128xi32>
    %56 = arith.addi %44, %55 : vector<8x128xi32>
    %c2_i32_18 = arith.constant 2 : i32
    %57 = vector.broadcast %c2_i32_18 : i32 to vector<8x128xi32>
    %58 = arith.andi %56, %57 : vector<8x128xi32>
    %c2_i32_19 = arith.constant 2 : i32
    %59 = vector.broadcast %c2_i32_19 : i32 to vector<8x128xi32>
    %60 = arith.cmpi eq, %58, %59 : vector<8x128xi32>
    %cst_20 = arith.constant 0.000000e+00 : f32
    %61 = vector.broadcast %cst_20 : f32 to vector<8x128xf32>
    %62 = arith.subf %61, %49 : vector<8x128xf32>
    %63 = arith.select %54, %62, %49 : vector<8x128xi1>, vector<8x128xf32>
    %cst_21 = arith.constant 0.000000e+00 : f32
    %64 = vector.broadcast %cst_21 : f32 to vector<8x128xf32>
    %65 = arith.subf %64, %50 : vector<8x128xf32>
    %66 = arith.select %60, %65, %50 : vector<8x128xi1>, vector<8x128xf32>
    %c0_22 = arith.constant 0 : index
    %c0_23 = arith.constant 0 : index
    %67 = vector.load %arg3[%c0_22, %c0_23] : memref<8x256xf32, #tpu.memory_space<vmem>>, vector<8x128xf32>
    tpu.vector_store %arg3[%c0_22, %c0_23], %63 {strides = array<i32>} : memref<8x256xf32, #tpu.memory_space<vmem>>, vector<8x128xf32>,
    %c0_24 = arith.constant 0 : index
    %c128 = arith.constant 128 : index
    %68 = vector.load %arg3[%c0_24, %c128] : memref<8x256xf32, #tpu.memory_space<vmem>>, vector<8x128xf32>
    tpu.vector_store %arg3[%c0_24, %c128], %66 {strides = array<i32>} : memref<8x256xf32, #tpu.memory_space<vmem>>, vector<8x128xf32>,
    return
  }
  func.func @transform_0(%arg0: i32) -> (i32, i32) {
    %c0_i32 = arith.constant 0 : i32
    %c0_i32_0 = arith.constant 0 : i32
    return %arg0, %c0_i32 : i32, i32
  }
  func.func @transform_1(%arg0: i32) -> (i32, i32) {
    %c0_i32 = arith.constant 0 : i32
    %c0_i32_0 = arith.constant 0 : i32
    %c0_i32_1 = arith.constant 0 : i32
    return %c0_i32, %c0_i32_0 : i32, i32
  }
  func.func @transform_2(%arg0: i32) -> (i32, i32) {
    %c0_i32 = arith.constant 0 : i32
    %c0_i32_0 = arith.constant 0 : i32
    return %arg0, %c0_i32 : i32, i32
  }
}

</mosaic_0001>

<llo_original>
// kernel: positional_embedding.1
$region0: #{positional_embedding.1}
  #allocation0 [shape = 'u32[]', space=smem, size = 0x4, offset = 0x4, fixed_abs, tag = 'smem constant byte address 0x4 - core index']
  #allocation1 [shape = 'u32[144,128]{1,0:T(1,128)}', space=vmem, size = 0x12000, scoped, tag = 'internal scratch']
  %s0 = inlined_call_operand.vmem [shape: f32[8,1], index: 0, kind: input, shape index: {}]
  %s1 = inlined_call_operand.vmem [shape: f32[1,128], index: 1, kind: input, shape index: {}]
  %s2 = inlined_call_operand.vmem [shape: f32[8,256], index: 2, kind: output, shape index: {}]
  %s3 = sld [smem:[#allocation0]]
  $region18: #{positional_embedding.1} parent=0
    _
  %s5 = ssub.s32 1, %s3
  %s6 = scalar_select 0, %s5, %s3
  // Predicated region
  $region2: #{positional_embedding.1} parent=0 // pred_check
    _
  $region3: #{positional_embedding.1} parent=0 // pred_check_branch
    %8 = sbr.rel (0) target = $region5
  $region4: #{positional_embedding.1} parent=0 // pred_region
    _
  $region5: #{positional_embedding.1} parent=0 // pred_fallthru
    _
  // Predicated region
  $region6: #{positional_embedding.1} parent=0 // pred_check
    _
  $region7: #{positional_embedding.1} parent=0 // pred_check_branch
    %10 = sbr.rel (0) target = $region9
  $region8: #{positional_embedding.1} parent=0 // pred_region
    _
  $region9: #{positional_embedding.1} parent=0 // pred_fallthru
    _
  %v11 = vld [vmem:[%s0] sm:$0xff]
  %v12 = vld [vmem:[%s1] sm:$0x1]
  %14 = vset.pattern.permute.xlu0 0
  %15 = vperm.xlu0 %14, %v11
  %v16 = vpop.permute.xlu0 %15
  %v19 = vlaneseq
  %v20 = vshrl.u32 %v19, 7
  %v21 = vsub.s32 0, %v20
  %v22 = vrot.slane %v12, %v21
  %v24 = vmul.f32 %v16, %v22
  %v25 = vmul.f32 %v24, 0.63661975
  %v26 = vadd.f32 %v25, 0.5
  %v27 = vfloor.f32 %v26
  %v28 = vmul.f32 %v27, 1.5703125
  %v29 = vsub.f32 %v24, %v28
  %v30 = vmul.f32 %v27, 0.0004837513
  %v31 = vsub.f32 %v29, %v30
  %v32 = vmul.f32 %v27, 7.54979e-08
  %v33 = vsub.f32 %v31, %v32
  %v34 = vmul.f32 %v33, %v33
  %v35 = vmul.f32 %v33, %v34
  %v36 = vmul.f32 %v34, -0.00019515296
  %v37 = vadd.f32 %v36, 0.008332161
  %v38 = vmul.f32 %v34, %v37
  %v39 = vadd.f32 %v38, -0.16666655
  %v40 = vmul.f32 %v35, %v39
  %v41 = vadd.f32 %v33, %v40
  %v42 = vmul.f32 %v34, 0.5
  %v43 = vsub.f32 1.0, %v42
  %v44 = vmul.f32 %v34, %v34
  %v45 = vmul.f32 %v34, 2.4433157e-05
  %v46 = vadd.f32 %v45, -0.0013887316
  %v47 = vmul.f32 %v34, %v46
  %v48 = vadd.f32 %v47, 0.041666646
  %v49 = vmul.f32 %v44, %v48
  %v50 = vadd.f32 %v43, %v49
  %v51 = vcvt.f32.s32.to.zero.pseudo %v27
  %v52 = vand.u32 %v51, 1
  %vm53 = vcmp.eq.s32.totalorder %v52, 1
  %v54 = vsel %vm53, %v50, %v41
  %v55 = vsel %vm53, %v41, %v50
  %v56 = vand.u32 %v51, 2
  %vm57 = vcmp.eq.s32.totalorder %v56, 2
  %v58 = vadd.s32 %v51, 1
  %v59 = vand.u32 %v58, 2
  %vm60 = vcmp.eq.s32.totalorder %v59, 2
  %v61 = vsub.f32 0.0, %v54
  %v62 = vsel %vm57, %v61, %v54
  %v63 = vsub.f32 0.0, %v55
  %v64 = vsel %vm60, %v63, %v55
  %65 = vst [vmem:[%s2] sm:$0xff] %v62
  %66 = vst [vmem:[%s2 + $0x8] sm:$0xff] %v64
  // Predicated region
  $region10: #{positional_embedding.1} parent=0 // pred_check
    _
  $region11: #{positional_embedding.1} parent=0 // pred_check_branch
    %68 = sbr.rel (0) target = $region13
  $region12: #{positional_embedding.1} parent=0 // pred_region
    _
  $region13: #{positional_embedding.1} parent=0 // pred_fallthru
    _
  // Predicated region
  $region14: #{positional_embedding.1} parent=0 // pred_check
    _
  $region15: #{positional_embedding.1} parent=0 // pred_check_branch
    %70 = sbr.rel (0) target = $region17
  $region16: #{positional_embedding.1} parent=0 // pred_region
    _
  $region17: #{positional_embedding.1} parent=0 // pred_fallthru
    _

</llo_original>
